<compile_context>
chip_gen: v6e
topology: v6e:2x2x1
jax: 0.10.0
libtpu: 0.0.40
codegen_flags: <defaults>
</compile_context>

<pallas_src>
import jax
import jax.numpy as jnp
from jax.experimental import pallas as pl
from jax.experimental.pallas import tpu as pltpu


def qnetwork_kernel(x_ref, w1_ref, b1_ref, w2_ref, b2_ref, w3_ref, b3_ref, o_ref):
    x = x_ref[...].astype(jnp.float32)            # (TILE_B, S)
    tb = x.shape[0]
    S = x.shape[1]
    H = w1_ref.shape[1]

    if S <= 8:
        # Tiny contraction dim: broadcast FMAs on the VPU beat an MXU matmul
        # (avoids MXU pipeline fill + result-FIFO pop for a K=2 dot).
        h1 = jnp.broadcast_to(b1_ref[...], (tb, H))
        for k in range(S):                        # unrolled at trace time (S static)
            h1 = h1 + x[:, k:k + 1] * w1_ref[k:k + 1, :]
    else:
        h1 = jnp.dot(x, w1_ref[...], preferred_element_type=jnp.float32) + b1_ref[...]
    h1 = jnp.maximum(h1, 0.0)                     # relu(fc1(x))

    h2 = jnp.dot(h1, w2_ref[...], preferred_element_type=jnp.float32) + b2_ref[...]
    h2 = jnp.maximum(h2, 0.0)                     # relu(fc2(x))

    out = jnp.dot(h2, w3_ref[...], preferred_element_type=jnp.float32) + b3_ref[...]
    o_ref[...] = out.astype(o_ref.dtype)          # fc3(x), narrow (TILE_B, A) store


def _round8(n):
    return max(8, (n // 8) * 8)


def qnetwork_forward(x, w1, b1, w2, b2, w3, b3, *, tile_b=4096, out_dtype=None):
    """Pallas forward: returns Q-values of shape (B, action_size).

    out_dtype: optional store dtype (e.g. jnp.bfloat16 on v6e/v7x to halve the
    dominant HBM writeback; accumulation stays f32). Defaults to x.dtype.
    """
    B, S = x.shape
    H = w1.shape[1]
    A = w3.shape[1]
    out_dtype = x.dtype if out_dtype is None else out_dtype

    # --- batch tiling ---------------------------------------------------------
    # Small/medium batches: a single full-batch tile (grid of 1) is fine.
    # Large batches: tile, and force >=2 (prefer 4) grid steps so the batch axis
    # can shard across both TensorCores on v7x via dimension_semantics.
    if B <= 2048:
        TILE_B = B if B <= tile_b else _round8(tile_b)
    else:
        TILE_B = min(_round8(tile_b), _round8(pl.cdiv(B, 4)))
    grid = (pl.cdiv(B, TILE_B),)

    # --- VMEM budget (derived from need; capped vs. actual chip capacity) -----
    itemsize = jnp.dtype(x.dtype).itemsize
    out_itemsize = jnp.dtype(out_dtype).itemsize
    param_bytes = sum(int(a.size) * a.dtype.itemsize for a in (w1, b1, w2, b2, w3, b3))
    tile_bytes = TILE_B * (S * itemsize + A * out_itemsize)       # one x + one out tile
    act_bytes = TILE_B * (2 * H + A) * 4                          # live f32 intermediates
    need = param_bytes + 2 * 2 * tile_bytes + act_bytes           # double-buffered tiles
    try:
        vmem_cap = int(pltpu.get_tpu_info().vmem_capacity_bytes)
    except Exception:  # pragma: no cover - conservative fallback (v7x-sized)
        vmem_cap = 64 << 20
    vmem_limit = int(min(max(need + (4 << 20), 16 << 20), int(0.6 * vmem_cap)))

    flops = 2 * B * (S * H + H * H + H * A)
    bytes_accessed = x.size * itemsize + B * A * out_itemsize + param_bytes

    resident = lambda shape: pl.BlockSpec(shape, lambda i: (0,) * len(shape))

    out = pl.pallas_call(
        qnetwork_kernel,
        out_shape=jax.ShapeDtypeStruct((B, A), out_dtype),
        grid=grid,
        in_specs=[
            pl.BlockSpec((TILE_B, S), lambda i: (i, 0)),   # x: tiled over batch
            resident(w1.shape), resident(b1.shape),        # weights: VMEM-resident
            resident(w2.shape), resident(b2.shape),
            resident(w3.shape), resident(b3.shape),
        ],
        out_specs=pl.BlockSpec((TILE_B, A), lambda i: (i, 0)),   # narrow, no pad
        compiler_params=pltpu.CompilerParams(
            dimension_semantics=("parallel",),             # megacore batch sharding
            vmem_limit_bytes=vmem_limit,
        ),
        cost_estimate=pl.CostEstimate(
            flops=flops, transcendentals=0, bytes_accessed=bytes_accessed),
    )(x, w1, b1, w2, b2, w3, b3)

    return out


def qnetwork_forward_xla(x, w1, b1, w2, b2, w3, b3):
    """Plain fused-XLA path for tiny serving batches (B ~ a few env steps)."""
    h = jnp.maximum(x @ w1 + b1, 0.0)
    h = jnp.maximum(h @ w2 + b2, 0.0)
    return h @ w3 + b3


def init_params(key, state_size, action_size, hidden_size=64):
    """Deterministic init mimicking PyTorch nn.Linear default U[-1/sqrt(fan_in), 1/sqrt(fan_in)]."""
    ks = jax.random.split(key, 6)

    def linear(kw, kb, fan_in, fan_out):
        bound = 1.0 / jnp.sqrt(fan_in)
        w = jax.random.uniform(kw, (fan_in, fan_out), jnp.float32, -bound, bound)
        b = jax.random.uniform(kb, (1, fan_out), jnp.float32, -bound, bound)
        return w, b

    w1, b1 = linear(ks[0], ks[1], state_size, hidden_size)
    w2, b2 = linear(ks[2], ks[3], hidden_size, hidden_size)
    w3, b3 = linear(ks[4], ks[5], hidden_size, action_size)
    return w1, b1, w2, b2, w3, b3


if __name__ == "__main__":
    # UnbalancedDisk observation space has shape (2,) -> state_size = 2.
    batch = 8
    state_size = 2
    action_size = 5
    hidden_size = 64

    key = jax.random.PRNGKey(0)
    k_x, k_p = jax.random.split(key)
    x = jax.random.normal(k_x, (batch, state_size), dtype=jnp.float32)
    params = init_params(k_p, state_size, action_size, hidden_size)

    # TODO(synk): in the training loop, route B<=64 env-step inference through
    # qnetwork_forward_xla (pure launch overhead in Pallas) and reserve this
    # kernel for replay-buffer-sized batches.
    out = qnetwork_forward(x, *params)
    out = jax.block_until_ready(out)

    # Reference check in plain JAX (same math, same params).
    w1, b1, w2, b2, w3, b3 = params
    ref = jnp.maximum(x @ w1 + b1, 0.0)
    ref = jnp.maximum(ref @ w2 + b2, 0.0)
    ref = ref @ w3 + b3
    assert out.shape == (batch, action_size)
    assert jnp.allclose(out, ref, atol=1e-5, rtol=1e-5)

    print("KERNEL_OK")
</pallas_src>

<mosaic_0001>
module attributes {stable_mosaic.version = 11 : i64} {
  func.func @qnetwork_kernel(%arg0: i32, %arg1: memref<8x2xf32, #tpu.memory_space<vmem>>, %arg2: memref<2x64xf32, #tpu.memory_space<vmem>>, %arg3: memref<1x64xf32, #tpu.memory_space<vmem>>, %arg4: memref<64x64xf32, #tpu.memory_space<vmem>>, %arg5: memref<1x64xf32, #tpu.memory_space<vmem>>, %arg6: memref<64x5xf32, #tpu.memory_space<vmem>>, %arg7: memref<1x5xf32, #tpu.memory_space<vmem>>, %arg8: memref<8x5xf32, #tpu.memory_space<vmem>>) attributes {dimension_semantics = [#tpu.dimension_semantics<parallel>], iteration_bounds = array<i64: 1>, scalar_prefetch = 0 : i64, scratch_operands = 0 : i64, tpu.core_type = #tpu.core_type<tc>, window_params = [{transform_indices = @transform_0, window_bounds = array<i64: 8, 2>}, {pipeline_mode = #tpu.pipeline_mode<synchronous>, transform_indices = @transform_1, window_bounds = array<i64: 2, 64>}, {pipeline_mode = #tpu.pipeline_mode<synchronous>, transform_indices = @transform_2, window_bounds = array<i64: 1, 64>}, {pipeline_mode = #tpu.pipeline_mode<synchronous>, transform_indices = @transform_3, window_bounds = array<i64: 64, 64>}, {pipeline_mode = #tpu.pipeline_mode<synchronous>, transform_indices = @transform_4, window_bounds = array<i64: 1, 64>}, {pipeline_mode = #tpu.pipeline_mode<synchronous>, transform_indices = @transform_5, window_bounds = array<i64: 64, 5>}, {pipeline_mode = #tpu.pipeline_mode<synchronous>, transform_indices = @transform_6, window_bounds = array<i64: 1, 5>}, {transform_indices = @transform_7, window_bounds = array<i64: 8, 5>}]} {
    %c0 = arith.constant 0 : index
    %c0_0 = arith.constant 0 : index
    %0 = vector.load %arg1[%c0, %c0_0] : memref<8x2xf32, #tpu.memory_space<vmem>>, vector<8x2xf32>
    %c0_1 = arith.constant 0 : index
    %c0_2 = arith.constant 0 : index
    %1 = vector.load %arg3[%c0_1, %c0_2] : memref<1x64xf32, #tpu.memory_space<vmem>>, vector<1x64xf32>
    %2 = vector.shape_cast %1 : vector<1x64xf32> to vector<1x64xf32>
    %3 = vector.broadcast %2 : vector<1x64xf32> to vector<8x64xf32>
    %4 = vector.extract_strided_slice %0 {offsets = [0, 0], sizes = [8, 1], strides = [1, 1]} : vector<8x2xf32> to vector<8x1xf32>
    %c0_3 = arith.constant 0 : index
    %c0_4 = arith.constant 0 : index
    %5 = vector.load %arg2[%c0_3, %c0_4] : memref<2x64xf32, #tpu.memory_space<vmem>>, vector<1x64xf32>
    %6 = vector.broadcast %4 : vector<8x1xf32> to vector<8x64xf32>
    %7 = vector.broadcast %5 : vector<1x64xf32> to vector<8x64xf32>
    %8 = arith.mulf %6, %7 : vector<8x64xf32>
    %9 = arith.addf %3, %8 : vector<8x64xf32>
    %10 = vector.extract_strided_slice %0 {offsets = [0, 1], sizes = [8, 1], strides = [1, 1]} : vector<8x2xf32> to vector<8x1xf32>
    %c1 = arith.constant 1 : index
    %c0_5 = arith.constant 0 : index
    %11 = vector.load %arg2[%c1, %c0_5] : memref<2x64xf32, #tpu.memory_space<vmem>>, vector<1x64xf32>
    %12 = vector.broadcast %10 : vector<8x1xf32> to vector<8x64xf32>
    %13 = vector.broadcast %11 : vector<1x64xf32> to vector<8x64xf32>
    %14 = arith.mulf %12, %13 : vector<8x64xf32>
    %15 = arith.addf %9, %14 : vector<8x64xf32>
    %cst = arith.constant 0.000000e+00 : f32
    %16 = vector.broadcast %cst : f32 to vector<8x64xf32>
    %17 = arith.maximumf %15, %16 : vector<8x64xf32>
    %c0_6 = arith.constant 0 : index
    %c0_7 = arith.constant 0 : index
    %18 = vector.load %arg4[%c0_6, %c0_7] : memref<64x64xf32, #tpu.memory_space<vmem>>, vector<64x64xf32>
    %cst_8 = arith.constant dense<0.000000e+00> : vector<8x64xf32>
    %19 = tpu.matmul %17, %18, %cst_8 {dimension_numbers = #tpu.dot_dimension_numbers<[1], [0], [0], [1], [0, 0, 1, 1], [], []>} : vector<8x64xf32>, vector<64x64xf32>, vector<8x64xf32> -> vector<8x64xf32>
    %c0_9 = arith.constant 0 : index
    %c0_10 = arith.constant 0 : index
    %20 = vector.load %arg5[%c0_9, %c0_10] : memref<1x64xf32, #tpu.memory_space<vmem>>, vector<1x64xf32>
    %21 = vector.broadcast %20 : vector<1x64xf32> to vector<8x64xf32>
    %22 = arith.addf %19, %21 : vector<8x64xf32>
    %cst_11 = arith.constant 0.000000e+00 : f32
    %23 = vector.broadcast %cst_11 : f32 to vector<8x64xf32>
    %24 = arith.maximumf %22, %23 : vector<8x64xf32>
    %c0_12 = arith.constant 0 : index
    %c0_13 = arith.constant 0 : index
    %25 = vector.load %arg6[%c0_12, %c0_13] : memref<64x5xf32, #tpu.memory_space<vmem>>, vector<64x5xf32>
    %cst_14 = arith.constant dense<0.000000e+00> : vector<8x5xf32>
    %26 = tpu.matmul %24, %25, %cst_14 {dimension_numbers = #tpu.dot_dimension_numbers<[1], [0], [0], [1], [0, 0, 1, 1], [], []>} : vector<8x64xf32>, vector<64x5xf32>, vector<8x5xf32> -> vector<8x5xf32>
    %c0_15 = arith.constant 0 : index
    %c0_16 = arith.constant 0 : index
    %27 = vector.load %arg7[%c0_15, %c0_16] : memref<1x5xf32, #tpu.memory_space<vmem>>, vector<1x5xf32>
    %28 = vector.broadcast %27 : vector<1x5xf32> to vector<8x5xf32>
    %29 = arith.addf %26, %28 : vector<8x5xf32>
    %c0_17 = arith.constant 0 : index
    %c0_18 = arith.constant 0 : index
    %30 = vector.load %arg8[%c0_17, %c0_18] : memref<8x5xf32, #tpu.memory_space<vmem>>, vector<8x5xf32>
    tpu.vector_store %arg8[%c0_17, %c0_18], %29 {strides = array<i32>} : memref<8x5xf32, #tpu.memory_space<vmem>>, vector<8x5xf32>,
    return
  }
  func.func @transform_0(%arg0: i32) -> (i32, i32) {
    %c0_i32 = arith.constant 0 : i32
    %c0_i32_0 = arith.constant 0 : i32
    return %arg0, %c0_i32 : i32, i32
  }
  func.func @transform_1(%arg0: i32) -> (i32, i32) {
    %c0_i32 = arith.constant 0 : i32
    %c0_i32_0 = arith.constant 0 : i32
    %c0_i32_1 = arith.constant 0 : i32
    return %c0_i32, %c0_i32_0 : i32, i32
  }
  func.func @transform_2(%arg0: i32) -> (i32, i32) {
    %c0_i32 = arith.constant 0 : i32
    %c0_i32_0 = arith.constant 0 : i32
    %c0_i32_1 = arith.constant 0 : i32
    return %c0_i32, %c0_i32_0 : i32, i32
  }
  func.func @transform_3(%arg0: i32) -> (i32, i32) {
    %c0_i32 = arith.constant 0 : i32
    %c0_i32_0 = arith.constant 0 : i32
    %c0_i32_1 = arith.constant 0 : i32
    return %c0_i32, %c0_i32_0 : i32, i32
  }
  func.func @transform_4(%arg0: i32) -> (i32, i32) {
    %c0_i32 = arith.constant 0 : i32
    %c0_i32_0 = arith.constant 0 : i32
    %c0_i32_1 = arith.constant 0 : i32
    return %c0_i32, %c0_i32_0 : i32, i32
  }
  func.func @transform_5(%arg0: i32) -> (i32, i32) {
    %c0_i32 = arith.constant 0 : i32
    %c0_i32_0 = arith.constant 0 : i32
    %c0_i32_1 = arith.constant 0 : i32
    return %c0_i32, %c0_i32_0 : i32, i32
  }
  func.func @transform_6(%arg0: i32) -> (i32, i32) {
    %c0_i32 = arith.constant 0 : i32
    %c0_i32_0 = arith.constant 0 : i32
    %c0_i32_1 = arith.constant 0 : i32
    return %c0_i32, %c0_i32_0 : i32, i32
  }
  func.func @transform_7(%arg0: i32) -> (i32, i32) {
    %c0_i32 = arith.constant 0 : i32
    %c0_i32_0 = arith.constant 0 : i32
    return %arg0, %c0_i32 : i32, i32
  }
}

</mosaic_0001>

<llo_original>
// kernel: tpu_custom_call.1
$region0: #{tpu_custom_call.1}
  #allocation0 [shape = 'u32[]', space=smem, size = 0x4, offset = 0x4, fixed_abs, tag = 'smem constant byte address 0x4 - core index']
  #allocation1 [shape = 'u32[144,128]{1,0:T(1,128)}', space=vmem, size = 0x12000, scoped, tag = 'internal scratch']
  %s0 = inlined_call_operand.vmem [shape: f32[8,2], index: 0, kind: input, shape index: {}]
  %s1 = inlined_call_operand.vmem [shape: f32[2,64], index: 1, kind: input, shape index: {}]
  %s2 = inlined_call_operand.vmem [shape: f32[1,64], index: 2, kind: input, shape index: {}]
  %s3 = inlined_call_operand.vmem [shape: f32[64,64], index: 3, kind: input, shape index: {}]
  %s4 = inlined_call_operand.vmem [shape: f32[1,64], index: 4, kind: input, shape index: {}]
  %s5 = inlined_call_operand.vmem [shape: f32[64,5], index: 5, kind: input, shape index: {}]
  %s6 = inlined_call_operand.vmem [shape: f32[1,5], index: 6, kind: input, shape index: {}]
  %s7 = inlined_call_operand.hbm [shape: f32[8,5], index: 7, kind: output, shape index: {}]
  %s8 = sld [smem:[#allocation0]]
  $region38: #{tpu_custom_call.1} parent=0
    _
  %s10 = ssub.s32 1, %s8
  %s11 = scalar_select 0, %s10, %s8
  $region1: #{tpu_custom_call.1} parent=0
    #allocation2 [shape = 'u8[4096]{0}', space=vmem, size = 0x1000, scoped, tag = 'output window, operand 0, single buffered']
    #allocation3 [shape = 's32[1]{0}', space=sflag, size = 0x4, scoped, tag = 'scoped memory for tpu_custom_call.1']
    %12 = vsyncpa [#allocation3], 0
    // Predicated region
    $region2: #{tpu_custom_call.1} parent=1 // pred_check
      _
    $region3: #{tpu_custom_call.1} parent=1 // pred_check_branch
      %14 = sbr.rel (0) target = $region5
    $region4: #{tpu_custom_call.1} parent=1 // pred_region
      _
    $region5: #{tpu_custom_call.1} parent=1 // pred_fallthru
      _
    // Predicated region
    $region6: #{tpu_custom_call.1} parent=1 // pred_check
      _
    $region7: #{tpu_custom_call.1} parent=1 // pred_check_branch
      %16 = sbr.rel (0) target = $region9
    $region8: #{tpu_custom_call.1} parent=1 // pred_region
      _
    $region9: #{tpu_custom_call.1} parent=1 // pred_fallthru
      _
    // Predicated region
    $region10: #{tpu_custom_call.1} parent=1 // pred_check
      _
    $region11: #{tpu_custom_call.1} parent=1 // pred_check_branch
      %18 = sbr.rel (0) target = $region13
    $region12: #{tpu_custom_call.1} parent=1 // pred_region
      _
    $region13: #{tpu_custom_call.1} parent=1 // pred_fallthru
      _
    // Predicated region
    $region14: #{tpu_custom_call.1} parent=1 // pred_check
      _
    $region15: #{tpu_custom_call.1} parent=1 // pred_check_branch
      %20 = sbr.rel (0) target = $region17
    $region16: #{tpu_custom_call.1} parent=1 // pred_region
      _
    $region17: #{tpu_custom_call.1} parent=1 // pred_fallthru
      _
    // Predicated region
    $region18: #{tpu_custom_call.1} parent=1 // pred_check
      _
    $region19: #{tpu_custom_call.1} parent=1 // pred_check_branch
      %22 = sbr.rel (0) target = $region21
    $region20: #{tpu_custom_call.1} parent=1 // pred_region
      _
    $region21: #{tpu_custom_call.1} parent=1 // pred_fallthru
      _
    // Predicated region
    $region22: #{tpu_custom_call.1} parent=1 // pred_check
      _
    $region23: #{tpu_custom_call.1} parent=1 // pred_check_branch
      %24 = sbr.rel (0) target = $region25
    $region24: #{tpu_custom_call.1} parent=1 // pred_region
      _
    $region25: #{tpu_custom_call.1} parent=1 // pred_fallthru
      _
    // Predicated region
    $region26: #{tpu_custom_call.1} parent=1 // pred_check
      _
    $region27: #{tpu_custom_call.1} parent=1 // pred_check_branch
      %26 = sbr.rel (0) target = $region29
    $region28: #{tpu_custom_call.1} parent=1 // pred_region
      _
    $region29: #{tpu_custom_call.1} parent=1 // pred_fallthru
      _
    %v27 = vld [vmem:[%s0] sm:$0xff]
    %v28 = vld [vmem:[%s2] sm:$0x1]
    %v30 = vlaneseq
    %v31 = vshrl.u32 %v30, 7
    %v32 = vsub.s32 0, %v31
    %v33 = vrot.slane %v28, %v32
    %v35 = vld [vmem:[%s1] sm:$0x1]
    %37 = vset.pattern.permute.xlu0 0
    %38 = vperm.xlu0 %37, %v27
    %v39 = vpop.permute.xlu0 %38
    %v41 = vlaneseq
    %v42 = vshrl.u32 %v41, 7
    %v43 = vsub.s32 0, %v42
    %v44 = vrot.slane %v35, %v43
    %v45 = vmul.f32 %v39, %v44
    %v46 = vadd.f32 %v33, %v45
    %v47 = vld [vmem:[%s1 + $0x1] sm:$0x1]
    %48 = vset.pattern.permute.xlu0 1
    %49 = vperm.xlu0 %48, %v27
    %v50 = vpop.permute.xlu0 %49
    %v52 = vlaneseq
    %v53 = vshrl.u32 %v52, 7
    %v54 = vsub.s32 0, %v53
    %v55 = vrot.slane %v47, %v54
    %v56 = vmul.f32 %v50, %v55
    %v57 = vadd.f32 %v46, %v56
    %v58 = vmax.f32 %v57, 0.0
    %v59 = vld [vmem:[%s3] sm:$0xff]
    %v60 = vld [vmem:[%s3 + $0x8] sm:$0xff]
    %v61 = vld [vmem:[%s3 + $0x10] sm:$0xff]
    %v62 = vld [vmem:[%s3 + $0x18] sm:$0xff]
    %v63 = vld [vmem:[%s3 + $0x20] sm:$0xff]
    %v64 = vld [vmem:[%s3 + $0x28] sm:$0xff]
    %v65 = vld [vmem:[%s3 + $0x30] sm:$0xff]
    %v66 = vld [vmem:[%s3 + $0x38] sm:$0xff]
    %v67 = vld [vmem:[%s4] sm:$0x1]
    %v69 = vlaneseq
    %v70 = vshrl.u32 %v69, 7
    %v71 = vsub.s32 0, %v70
    %v72 = vrot.slane %v67, %v71
    %vm74 = vcmask 523264
    %v76 = vsel %vm74, %v58, 0
    %78 = vmatprep.subr.mxu0 0.0
    %79 = vmatpush1.msra.mxu0 0.0
    %80 = vmatprep.subr.mxu0 0.0
    %81 = vmatpush1.msra.mxu0 0.0
    %82 = vmatprep.subr.mxu0 0.0
    %83 = vmatpush1.msra.mxu0 0.0
    %84 = vmatprep.subr.mxu0 0.0
    %85 = vmatpush1.msra.mxu0 0.0
    %86 = vmatprep.subr.mxu0 0.0
    %87 = vmatpush1.msra.mxu0 0.0
    %88 = vmatprep.subr.mxu0 0.0
    %89 = vmatpush1.msra.mxu0 0.0
    %90 = vmatprep.subr.mxu0 0.0
    %91 = vmatpush1.msra.mxu0 0.0
    %92 = vmatprep.subr.mxu0 0.0
    %93 = vmatpush1.msra.mxu0 0.0
    %94 = vmatprep.subr.mxu0 0.0
    %95 = vmatpush1.msra.mxu0 %v66
    %96 = vmatprep.subr.mxu0 0.0
    %97 = vmatpush1.msra.mxu0 %v65
    %98 = vmatprep.subr.mxu0 0.0
    %99 = vmatpush1.msra.mxu0 %v64
    %100 = vmatprep.subr.mxu0 0.0
    %101 = vmatpush1.msra.mxu0 %v63
    %102 = vmatprep.subr.mxu0 0.0
    %103 = vmatpush1.msra.mxu0 %v62
    %104 = vmatprep.subr.mxu0 0.0
    %105 = vmatpush1.msra.mxu0 %v61
    %106 = vmatprep.subr.mxu0 0.0
    %107 = vmatpush1.msra.mxu0 %v60
    %108 = vmatprep.subr.mxu0 0.0
    %109 = vmatpush1.msra.mxu0 %v59
    %110 = vmatprep.subr.mxu0 0.0
    %111 = vmatpush2.msra.mxu0 0.0
    %112 = vmatprep.subr.mxu0 0.0
    %113 = vmatpush2.msra.mxu0 0.0
    %114 = vmatprep.subr.mxu0 0.0
    %115 = vmatpush2.msra.mxu0 0.0
    %116 = vmatprep.subr.mxu0 0.0
    %117 = vmatpush2.msra.mxu0 0.0
    %118 = vmatprep.subr.mxu0 0.0
    %119 = vmatpush2.msra.mxu0 0.0
    %120 = vmatprep.subr.mxu0 0.0
    %121 = vmatpush2.msra.mxu0 0.0
    %122 = vmatprep.subr.mxu0 0.0
    %123 = vmatpush2.msra.mxu0 0.0
    %124 = vmatprep.subr.mxu0 0.0
    %125 = vmatpush2.msra.mxu0 0.0
    %126 = vmatprep.subr.mxu0 0.0
    %127 = vmatpush2.msra.mxu0 0.0
    %128 = vmatprep.subr.mxu0 0.0
    %129 = vmatpush2.msra.mxu0 0.0
    %130 = vmatprep.subr.mxu0 0.0
    %131 = vmatpush2.msra.mxu0 0.0
    %132 = vmatprep.subr.mxu0 0.0
    %133 = vmatpush2.msra.mxu0 0.0
    %134 = vmatprep.subr.mxu0 0.0
    %135 = vmatpush2.msra.mxu0 0.0
    %136 = vmatprep.subr.mxu0 0.0
    %137 = vmatpush2.msra.mxu0 0.0
    %138 = vmatprep.subr.mxu0 0.0
    %139 = vmatpush2.msra.mxu0 0.0
    %140 = vmatprep.subr.mxu0 0.0
    %141 = vmatpush2.msra.mxu0 0.0
    %142 = vmatprep.mubr.f32.mxu0 0.0
    %143 = vmatmul.mubr.f32.gmra.mxu0 %v76
    %v144 = vpop.f32.mrf.mxu0
    %v145 = vadd.f32 %v72, %v144
    %v146 = vpop.f32.mrf.mxu0
    %147 = vdwg.mxu0
    %v148 = vmax.f32 %v145, 0.0
    %v149 = vld [vmem:[%s5] sm:$0xff]
    %v150 = vld [vmem:[%s5 + $0x8] sm:$0xff]
    %v151 = vld [vmem:[%s5 + $0x10] sm:$0xff]
    %v152 = vld [vmem:[%s5 + $0x18] sm:$0xff]
    %v153 = vld [vmem:[%s5 + $0x20] sm:$0xff]
    %v154 = vld [vmem:[%s5 + $0x28] sm:$0xff]
    %v155 = vld [vmem:[%s5 + $0x30] sm:$0xff]
    %v156 = vld [vmem:[%s5 + $0x38] sm:$0xff]
    %v157 = vld [vmem:[%s6] sm:$0x1]
    %v159 = vlaneseq
    %v160 = vshrl.u32 %v159, 7
    %v161 = vsub.s32 0, %v160
    %v162 = vrot.slane %v157, %v161
    %v165 = vsel %vm74, %v148, 0
    %167 = vmatprep.subr.mxu0 0.0
    %168 = vmatpush1.msra.mxu0 0.0
    %169 = vmatprep.subr.mxu0 0.0
    %170 = vmatpush1.msra.mxu0 0.0
    %171 = vmatprep.subr.mxu0 0.0
    %172 = vmatpush1.msra.mxu0 0.0
    %173 = vmatprep.subr.mxu0 0.0
    %174 = vmatpush1.msra.mxu0 0.0
    %175 = vmatprep.subr.mxu0 0.0
    %176 = vmatpush1.msra.mxu0 0.0
    %177 = vmatprep.subr.mxu0 0.0
    %178 = vmatpush1.msra.mxu0 0.0
    %179 = vmatprep.subr.mxu0 0.0
    %180 = vmatpush1.msra.mxu0 0.0
    %181 = vmatprep.subr.mxu0 0.0
    %182 = vmatpush1.msra.mxu0 0.0
    %183 = vmatprep.subr.mxu0 0.0
    %184 = vmatpush1.msra.mxu0 %v156
    %185 = vmatprep.subr.mxu0 0.0
    %186 = vmatpush1.msra.mxu0 %v155
    %187 = vmatprep.subr.mxu0 0.0
    %188 = vmatpush1.msra.mxu0 %v154
    %189 = vmatprep.subr.mxu0 0.0
    %190 = vmatpush1.msra.mxu0 %v153
    %191 = vmatprep.subr.mxu0 0.0
    %192 = vmatpush1.msra.mxu0 %v152
    %193 = vmatprep.subr.mxu0 0.0
    %194 = vmatpush1.msra.mxu0 %v151
    %195 = vmatprep.subr.mxu0 0.0
    %196 = vmatpush1.msra.mxu0 %v150
    %197 = vmatprep.subr.mxu0 0.0
    %198 = vmatpush1.msra.mxu0 %v149
    %199 = vmatprep.subr.mxu0 0.0
    %200 = vmatpush2.msra.mxu0 0.0
    %201 = vmatprep.subr.mxu0 0.0
    %202 = vmatpush2.msra.mxu0 0.0
    %203 = vmatprep.subr.mxu0 0.0
    %204 = vmatpush2.msra.mxu0 0.0
    %205 = vmatprep.subr.mxu0 0.0
    %206 = vmatpush2.msra.mxu0 0.0
    %207 = vmatprep.subr.mxu0 0.0
    %208 = vmatpush2.msra.mxu0 0.0
    %209 = vmatprep.subr.mxu0 0.0
    %210 = vmatpush2.msra.mxu0 0.0
    %211 = vmatprep.subr.mxu0 0.0
    %212 = vmatpush2.msra.mxu0 0.0
    %213 = vmatprep.subr.mxu0 0.0
    %214 = vmatpush2.msra.mxu0 0.0
    %215 = vmatprep.subr.mxu0 0.0
    %216 = vmatpush2.msra.mxu0 0.0
    %217 = vmatprep.subr.mxu0 0.0
    %218 = vmatpush2.msra.mxu0 0.0
    %219 = vmatprep.subr.mxu0 0.0
    %220 = vmatpush2.msra.mxu0 0.0
    %221 = vmatprep.subr.mxu0 0.0
    %222 = vmatpush2.msra.mxu0 0.0
    %223 = vmatprep.subr.mxu0 0.0
    %224 = vmatpush2.msra.mxu0 0.0
    %225 = vmatprep.subr.mxu0 0.0
    %226 = vmatpush2.msra.mxu0 0.0
    %227 = vmatprep.subr.mxu0 0.0
    %228 = vmatpush2.msra.mxu0 0.0
    %229 = vmatprep.subr.mxu0 0.0
    %230 = vmatpush2.msra.mxu0 0.0
    %231 = vmatprep.mubr.f32.mxu0 0.0
    %232 = vmatmul.mubr.f32.gmra.mxu0 %v165
    %v233 = vpop.f32.mrf.mxu0
    %v234 = vadd.f32 %v162, %v233
    %v235 = vpop.f32.mrf.mxu0
    %236 = vdwg.mxu0
    %vm237 = vcmask 39936
    %238 = vst.msk [vmem:[#allocation2] sm:$0xff] %vm237, %v234
    // Predicated region
    $region30: #{tpu_custom_call.1} parent=1 // pred_check
      _
    $region31: #{tpu_custom_call.1} parent=1 // pred_check_branch
      %240 = sbr.rel (0) target = $region33
    $region32: #{tpu_custom_call.1} parent=1 // pred_region
      %s242 = ssub.s32 128, 128
      %243 = vsyncadd [#allocation3], %s242
      %s245 = sshll.u32 [#allocation2], 4
      %s246 = int_to_ptr.vmem [resolvable:$true] %s245
      %248 = dma.vmem_to_hbm [thread:$0]  %s246, 128, %s7, [#allocation3]
    $region33: #{tpu_custom_call.1} parent=1 // pred_fallthru
      _
    // Predicated region
    $region34: #{tpu_custom_call.1} parent=1 // pred_check
      _
    $region35: #{tpu_custom_call.1} parent=1 // pred_check_branch
      %250 = sbr.rel (0) target = $region37
    $region36: #{tpu_custom_call.1} parent=1 // pred_region
      %251 = dma.done [#allocation3], 128
    $region37: #{tpu_custom_call.1} parent=1 // pred_fallthru
      _
    %252 = vsyncpa [#allocation3], 1

</llo_original>
